<compile_context>
chip_gen: v5e
topology: v5e:2x2
jax: 0.10.0
libtpu: 0.0.40
codegen_flags: <defaults>
</compile_context>

<pallas_src>
import functools

import jax
import jax.numpy as jnp
from jax.experimental import pallas as pl
from jax.experimental.pallas import tpu as pltpu


def _focal_loss_kernel(x_ref, t_ref, a_ref, o_ref, acc_ref, *,
                       gamma, hw_total, tile_hw, num_classes, need_mask):
    h = pl.program_id(1)

    @pl.when(h == 0)
    def _init():
        acc_ref[...] = jnp.zeros_like(acc_ref)

    x = x_ref[...].astype(jnp.float32)            # (C, T)  classes on sublanes
    tgt = t_ref[...]                              # (1, T)  int32
    a = a_ref[...].astype(jnp.float32)            # (C, 1)

    # log_softmax over the class (sublane) axis, numerically stable
    m = jnp.max(x, axis=0, keepdims=True)         # (1, T)
    z = x - m
    lse = jnp.log(jnp.sum(jnp.exp(z), axis=0, keepdims=True))
    logsm = z - lse                               # (C, T)

    if num_classes == 2:
        # select instead of one-hot gather for the binary case
        is0 = (tgt == 0)
        logpt = jnp.where(is0, logsm[0:1, :], logsm[1:2, :])    # (1, T)
        at = jnp.where(is0, a[0:1, :], a[1:2, :])               # (1, T)
    else:
        cls = jax.lax.broadcasted_iota(jnp.int32, (num_classes, tile_hw), 0)
        onehot = (cls == tgt).astype(jnp.float32)               # (C, T)
        logpt = jnp.sum(logsm * onehot, axis=0, keepdims=True)  # (1, T)
        at = jnp.sum(a * onehot, axis=0, keepdims=True)         # (1, T)

    pt = jnp.exp(logpt)
    one_minus = 1.0 - pt
    if gamma == 2.0:
        focal = one_minus * one_minus
    elif gamma == 1.0:
        focal = one_minus
    elif gamma == 0.0:
        focal = jnp.ones_like(one_minus)
    else:
        focal = one_minus ** gamma
    loss = -focal * (logpt * at)                  # (1, T)

    if need_mask:
        lanes = h * tile_hw + jax.lax.broadcasted_iota(
            jnp.int32, (1, tile_hw), 1)
        loss = jnp.where(lanes < hw_total, loss, 0.0)

    # vector partial-sum accumulator; full reduce deferred to finalize
    acc_ref[...] += loss

    @pl.when(h == pl.num_programs(1) - 1)
    def _finalize():
        total = jnp.sum(acc_ref[...])
        o_ref[...] = jnp.broadcast_to(total, o_ref.shape).astype(o_ref.dtype)


def _pick_tile_hw(hw, num_classes):
    # keep each logits block around <= 4 MiB of f32 (safe for v7x 64 MiB VMEM
    # with double buffering), lane-aligned to 128
    max_elems = 1 << 20
    cap = max(128, (max_elems // max(num_classes, 1)) // 128 * 128)
    return hw if hw <= cap else cap


def focal_loss(logits_nchw, target_nhw, *, gamma=2.0, alpha=0.25,
               size_average=True):
    """logits_nchw: (N, C, H, W) float; target_nhw: (N, H, W) int."""
    N, C, H, W = logits_nchw.shape
    HW = H * W
    M = N * HW

    # alpha tensor as in __init__: scalar -> [alpha, 1 - alpha]
    if isinstance(alpha, (float, int)):
        alpha_vec = jnp.array([alpha, 1.0 - alpha], dtype=jnp.float32)
    else:
        alpha_vec = jnp.asarray(alpha, dtype=jnp.float32)
    assert alpha_vec.shape[0] == C, "alpha gather requires len(alpha) == num classes"
    a = alpha_vec.reshape(C, 1)

    # Free reshapes only (no transpose, no pad): kernel indexes NCHW directly.
    x = logits_nchw.reshape(N, C, HW)
    t = target_nhw.reshape(N, 1, HW).astype(jnp.int32)

    tile_hw = _pick_tile_hw(HW, C)
    n_hw = pl.cdiv(HW, tile_hw)
    need_mask = (HW % tile_hw) != 0

    kernel = functools.partial(
        _focal_loss_kernel,
        gamma=float(gamma), hw_total=HW, tile_hw=tile_hw,
        num_classes=C, need_mask=need_mask,
    )

    partials = pl.pallas_call(
        kernel,
        out_shape=jax.ShapeDtypeStruct((N, 1, 128), jnp.float32),
        grid_spec=pltpu.PrefetchScalarGridSpec(
            num_scalar_prefetch=0,
            grid=(N, n_hw),
            in_specs=[
                pl.BlockSpec((None, C, tile_hw), lambda n, h: (n, 0, h)),
                pl.BlockSpec((None, 1, tile_hw), lambda n, h: (n, 0, h)),
                pl.BlockSpec((C, 1), lambda n, h: (0, 0)),
            ],
            out_specs=pl.BlockSpec((None, 1, 128), lambda n, h: (n, 0, 0)),
            scratch_shapes=[pltpu.VMEM((1, tile_hw), jnp.float32)],
        ),
        compiler_params=pltpu.CompilerParams(
            dimension_semantics=("parallel", "arbitrary")),
    )(x, t, a)

    total = jnp.sum(partials[:, 0, 0])
    if size_average:
        return total / jnp.float32(M)
    return total


def _focal_loss_ref(logits_nchw, target_nhw, gamma=2.0, alpha=0.25,
                    size_average=True):
    N, C, H, W = logits_nchw.shape
    x = jnp.transpose(logits_nchw.reshape(N, C, H * W), (0, 2, 1)).reshape(-1, C)
    t = target_nhw.reshape(-1)
    if isinstance(alpha, (float, int)):
        alpha_vec = jnp.array([alpha, 1.0 - alpha], dtype=jnp.float32)
    else:
        alpha_vec = jnp.asarray(alpha, dtype=jnp.float32)
    logsm = jax.nn.log_softmax(x.astype(jnp.float32), axis=-1)
    logpt = jnp.take_along_axis(logsm, t[:, None], axis=1)[:, 0]
    pt = jnp.exp(logpt)
    at = alpha_vec[t]
    loss = -1.0 * (1.0 - pt) ** gamma * (logpt * at)
    return loss.mean() if size_average else loss.sum()


if __name__ == "__main__":
    key = jax.random.PRNGKey(0)
    k1, k2 = jax.random.split(key)

    # Default alpha=0.25 -> alpha tensor has 2 entries, so num classes C = 2.
    N, C, H, W = 2, 2, 16, 16
    logits = jax.random.normal(k1, (N, C, H, W), dtype=jnp.float32)
    target = jax.random.randint(k2, (N, H, W), 0, C, dtype=jnp.int32)

    out = focal_loss(logits, target, gamma=2.0, alpha=0.25, size_average=True)
    out = jax.block_until_ready(out)

    ref = _focal_loss_ref(logits, target)
    assert jnp.allclose(out, ref, atol=1e-5, rtol=1e-5), (out, ref)

    print("KERNEL_OK")
</pallas_src>

<mosaic_0001>
module attributes {stable_mosaic.version = 11 : i64} {
  func.func @_focal_loss_kernel(%arg0: i32, %arg1: i32, %arg2: memref<1x2x256xf32, #tpu.memory_space<vmem>>, %arg3: memref<1x1x256xi32, #tpu.memory_space<vmem>>, %arg4: memref<2x1xf32, #tpu.memory_space<vmem>>, %arg5: memref<1x1x128xf32, #tpu.memory_space<vmem>>, %arg6: memref<1x256xf32, #tpu.memory_space<vmem>>) attributes {dimension_semantics = [#tpu.dimension_semantics<parallel>, #tpu.dimension_semantics<arbitrary>], iteration_bounds = array<i64: 2, 1>, scalar_prefetch = 0 : i64, scratch_operands = 1 : i64, tpu.core_type = #tpu.core_type<tc>, window_params = [{transform_indices = @transform_0, window_bounds = array<i64: 1, 2, 256>}, {transform_indices = @transform_1, window_bounds = array<i64: 1, 1, 256>}, {pipeline_mode = #tpu.pipeline_mode<synchronous>, transform_indices = @transform_2, window_bounds = array<i64: 2, 1>}, {transform_indices = @transform_3, window_bounds = array<i64: 1, 1, 128>}]} {
    %c0_i32 = arith.constant 0 : i32
    %0 = arith.cmpi eq, %arg1, %c0_i32 : i32
    %1 = arith.extui %0 : i1 to i32
    %c0_i32_0 = arith.constant 0 : i32
    %2 = arith.cmpi ne, %1, %c0_i32_0 : i32
    scf.if %2 {
      %cst_18 = arith.constant 0.000000e+00 : f32
      %44 = vector.broadcast %cst_18 : f32 to vector<1x256xf32>
      %c0_19 = arith.constant 0 : index
      %c0_20 = arith.constant 0 : index
      %45 = vector.load %arg6[%c0_19, %c0_20] : memref<1x256xf32, #tpu.memory_space<vmem>>, vector<1x256xf32>
      tpu.vector_store %arg6[%c0_19, %c0_20], %44 {strides = array<i32>} : memref<1x256xf32, #tpu.memory_space<vmem>>, vector<1x256xf32>,
    } else {
    }
    %c0 = arith.constant 0 : index
    %c0_1 = arith.constant 0 : index
    %c0_2 = arith.constant 0 : index
    %3 = vector.load %arg2[%c0, %c0_1, %c0_2] : memref<1x2x256xf32, #tpu.memory_space<vmem>>, vector<1x2x256xf32>
    %4 = vector.shape_cast %3 : vector<1x2x256xf32> to vector<2x256xf32>
    %c0_3 = arith.constant 0 : index
    %c0_4 = arith.constant 0 : index
    %c0_5 = arith.constant 0 : index
    %5 = vector.load %arg3[%c0_3, %c0_4, %c0_5] : memref<1x1x256xi32, #tpu.memory_space<vmem>>, vector<1x1x256xi32>
    %6 = vector.shape_cast %5 : vector<1x1x256xi32> to vector<1x256xi32>
    %c0_6 = arith.constant 0 : index
    %c0_7 = arith.constant 0 : index
    %7 = vector.load %arg4[%c0_6, %c0_7] : memref<2x1xf32, #tpu.memory_space<vmem>>, vector<2x1xf32>
    %cst = arith.constant dense<0xFF800000> : vector<256xf32>
    %8 = vector.multi_reduction <maximumf>, %4, %cst [0] : vector<2x256xf32> to vector<256xf32>
    %9 = vector.shape_cast %8 : vector<256xf32> to vector<1x256xf32>
    %10 = vector.broadcast %9 : vector<1x256xf32> to vector<2x256xf32>
    %11 = arith.subf %4, %10 : vector<2x256xf32>
    %12 = math.exp %11 : vector<2x256xf32>
    %cst_8 = arith.constant dense<0.000000e+00> : vector<256xf32>
    %13 = vector.multi_reduction <add>, %12, %cst_8 [0] : vector<2x256xf32> to vector<256xf32>
    %14 = vector.shape_cast %13 : vector<256xf32> to vector<1x256xf32>
    %15 = math.log %14 : vector<1x256xf32>
    %16 = vector.broadcast %15 : vector<1x256xf32> to vector<2x256xf32>
    %17 = arith.subf %11, %16 : vector<2x256xf32>
    %c0_i32_9 = arith.constant 0 : i32
    %18 = vector.broadcast %c0_i32_9 : i32 to vector<1x256xi32>
    %19 = arith.cmpi eq, %6, %18 : vector<1x256xi32>
    %20 = vector.extract_strided_slice %17 {offsets = [0, 0], sizes = [1, 256], strides = [1, 1]} : vector<2x256xf32> to vector<1x256xf32>
    %21 = vector.extract_strided_slice %17 {offsets = [1, 0], sizes = [1, 256], strides = [1, 1]} : vector<2x256xf32> to vector<1x256xf32>
    %22 = arith.select %19, %20, %21 : vector<1x256xi1>, vector<1x256xf32>
    %23 = vector.extract_strided_slice %7 {offsets = [0, 0], sizes = [1, 1], strides = [1, 1]} : vector<2x1xf32> to vector<1x1xf32>
    %24 = vector.extract_strided_slice %7 {offsets = [1, 0], sizes = [1, 1], strides = [1, 1]} : vector<2x1xf32> to vector<1x1xf32>
    %25 = vector.shape_cast %23 : vector<1x1xf32> to vector<1x1xf32>
    %26 = vector.broadcast %25 : vector<1x1xf32> to vector<1x256xf32>
    %27 = vector.shape_cast %24 : vector<1x1xf32> to vector<1x1xf32>
    %28 = vector.broadcast %27 : vector<1x1xf32> to vector<1x256xf32>
    %29 = arith.select %19, %26, %28 : vector<1x256xi1>, vector<1x256xf32>
    %30 = math.exp %22 : vector<1x256xf32>
    %cst_10 = arith.constant 1.000000e+00 : f32
    %31 = vector.broadcast %cst_10 : f32 to vector<1x256xf32>
    %32 = arith.subf %31, %30 : vector<1x256xf32>
    %33 = arith.mulf %32, %32 : vector<1x256xf32>
    %cst_11 = arith.constant 0.000000e+00 : f32
    %34 = vector.broadcast %cst_11 : f32 to vector<1x256xf32>
    %35 = arith.subf %34, %33 : vector<1x256xf32>
    %36 = arith.mulf %22, %29 : vector<1x256xf32>
    %37 = arith.mulf %35, %36 : vector<1x256xf32>
    %c0_12 = arith.constant 0 : index
    %c0_13 = arith.constant 0 : index
    %38 = vector.load %arg6[%c0_12, %c0_13] : memref<1x256xf32, #tpu.memory_space<vmem>>, vector<1x256xf32>
    %39 = arith.addf %38, %37 : vector<1x256xf32>
    %c0_14 = arith.constant 0 : index
    %c0_15 = arith.constant 0 : index
    %40 = vector.load %arg6[%c0_14, %c0_15] : memref<1x256xf32, #tpu.memory_space<vmem>>, vector<1x256xf32>
    tpu.vector_store %arg6[%c0_14, %c0_15], %39 {strides = array<i32>} : memref<1x256xf32, #tpu.memory_space<vmem>>, vector<1x256xf32>,
    %c0_i32_16 = arith.constant 0 : i32
    %41 = arith.cmpi eq, %arg1, %c0_i32_16 : i32
    %42 = arith.extui %41 : i1 to i32
    %c0_i32_17 = arith.constant 0 : i32
    %43 = arith.cmpi ne, %42, %c0_i32_17 : i32
    scf.if %43 {
      %c0_18 = arith.constant 0 : index
      %c0_19 = arith.constant 0 : index
      %44 = vector.load %arg6[%c0_18, %c0_19] : memref<1x256xf32, #tpu.memory_space<vmem>>, vector<1x256xf32>
      %45 = vector.shape_cast %44 : vector<1x256xf32> to vector<1x1x256xf32>
      %cst_20 = arith.constant dense<0.000000e+00> : vector<1xf32>
      %46 = vector.multi_reduction <add>, %45, %cst_20 [1, 2] : vector<1x1x256xf32> to vector<1xf32>
      %47 = vector.shape_cast %46 : vector<1xf32> to vector<1x1x1xf32>
      %48 = vector.extract %47[0, 0, 0] : f32 from vector<1x1x1xf32>
      %49 = vector.broadcast %48 : f32 to vector<1x128xf32>
      %c0_21 = arith.constant 0 : index
      %c0_22 = arith.constant 0 : index
      %c0_23 = arith.constant 0 : index
      %50 = vector.load %arg5[%c0_21, %c0_22, %c0_23] : memref<1x1x128xf32, #tpu.memory_space<vmem>>, vector<1x1x128xf32>
      %51 = vector.shape_cast %50 : vector<1x1x128xf32> to vector<1x128xf32>
      %52 = vector.shape_cast %49 : vector<1x128xf32> to vector<1x1x128xf32>
      tpu.vector_store %arg5[%c0_21, %c0_22, %c0_23], %52 {strides = array<i32>} : memref<1x1x128xf32, #tpu.memory_space<vmem>>, vector<1x1x128xf32>,
    } else {
    }
    return
  }
  func.func @transform_0(%arg0: i32, %arg1: i32) -> (i32, i32, i32) {
    %c0_i32 = arith.constant 0 : i32
    %c0_i32_0 = arith.constant 0 : i32
    return %arg0, %c0_i32, %arg1 : i32, i32, i32
  }
  func.func @transform_1(%arg0: i32, %arg1: i32) -> (i32, i32, i32) {
    %c0_i32 = arith.constant 0 : i32
    %c0_i32_0 = arith.constant 0 : i32
    return %arg0, %c0_i32, %arg1 : i32, i32, i32
  }
  func.func @transform_2(%arg0: i32, %arg1: i32) -> (i32, i32) {
    %c0_i32 = arith.constant 0 : i32
    %c0_i32_0 = arith.constant 0 : i32
    %c0_i32_1 = arith.constant 0 : i32
    return %c0_i32, %c0_i32_0 : i32, i32
  }
  func.func @transform_3(%arg0: i32, %arg1: i32) -> (i32, i32, i32) {
    %c0_i32 = arith.constant 0 : i32
    %c0_i32_0 = arith.constant 0 : i32
    %c0_i32_1 = arith.constant 0 : i32
    return %arg0, %c0_i32, %c0_i32_0 : i32, i32, i32
  }
}

</mosaic_0001>

<llo_original>
// kernel: tpu_custom_call.1
$region0: #{tpu_custom_call.1}
  #allocation0 [shape = 'u32[]', space=smem, size = 0x4, offset = 0x4, fixed_abs, tag = 'smem constant byte address 0x4 - core index']
  #allocation1 [shape = 'u32[72,128]{1,0:T(1,128)}', space=vmem, size = 0x9000, scoped, tag = 'internal scratch']
  #allocation2 [shape = 'f32[1,256]{1,0:T(1,128)}', space=vmem, size = 0x400, scoped, tag = 'scratch operand']
  %s0 = inlined_call_operand.hbm [shape: f32[2,2,256], index: 0, kind: input, shape index: {}]
  %s1 = inlined_call_operand.hbm [shape: s32[2,1,256], index: 1, kind: input, shape index: {}]
  %s2 = inlined_call_operand.vmem [shape: f32[2,1], index: 2, kind: input, shape index: {}]
  %s3 = inlined_call_operand.hbm [shape: f32[2,1,128], index: 3, kind: output, shape index: {}]
  %s4 = sld [smem:[#allocation0]]
  $region61: #{tpu_custom_call.1} parent=0
    _
  %s6 = ssub.s32 1, %s4
  %s7 = scalar_select 0, %s6, %s4
  $region1: #{tpu_custom_call.1} parent=0
    #allocation3 [shape = 'u8[4096]{0}', space=vmem, size = 0x1000, scoped, tag = 'input window, operand 0']
    #allocation4 [shape = 's32[2]{0}', space=sflag, size = 0x8, scoped, tag = 'scoped memory for tpu_custom_call.1']
    #allocation5 [shape = 's32[2]{0}', space=sflag, size = 0x8, scoped, tag = 'scoped memory for tpu_custom_call.1']
    #allocation6 [shape = 'u8[2048]{0}', space=vmem, size = 0x800, scoped, tag = 'input window, operand 1']
    #allocation7 [shape = 's32[2]{0}', space=sflag, size = 0x8, scoped, tag = 'scoped memory for tpu_custom_call.1']
    #allocation8 [shape = 'u8[1024]{0}', space=vmem, size = 0x400, scoped, tag = 'output window, operand 0']
    %8 = vsyncpa [#allocation4], 0
    %s9 = scalar_lea.sflag [#allocation4], 1
    %10 = vsyncpa %s9, 0
    %11 = vsyncpa [#allocation7], 0
    %s12 = scalar_lea.sflag [#allocation7], 1
    %13 = vsyncpa %s12, 0
    %14 = vsyncpa [#allocation5], 0
    %s15 = scalar_lea.sflag [#allocation5], 1
    %16 = vsyncpa %s15, 0
    loop: start=0, step=1, limit=4
    $region2: #{tpu_custom_call.1} parent=1 // loop_pre_header
      _
    $region3: #{tpu_custom_call.1} parent=1 // loop_header
      %s18 = sphi 0, %s22
      %p19 = scmp.ge.s32.totalorder %s18, 4
      %s25 = sphi 0, %s37
      %s26 = sphi 0, %s33
      %s27 = sphi 0, %s25
      %s28 = sphi 0, %s26
      %s29 = sphi 0, %s27
      %s30 = sphi 0, %s28
      %s42 = sphi 0, %s44
      %s45 = sphi 0, %s42
      %s46 = sphi 0, %s45
      %s62 = sphi 0, %s46
      %s70 = sphi 0, %s72
      %s73 = sphi 0, %s70
      %s74 = sphi 0, %s73
      %s90 = sphi 0, %s74
      %s94 = sphi 0, %s94
      %s96 = sphi 0, %s94
      %s97 = sphi 0, %s96
      %s111 = sphi 0, %s97
      %s117 = sphi 0, %s119
      %s120 = sphi 0, %s117
      %s121 = sphi 0, %s120
      %s137 = sphi 0, %s121
    $region4: #{tpu_custom_call.1} parent=1 // loop_header_branch
      %21 = sbr.rel (%p19) target = $region8
    $region5: #{tpu_custom_call.1} parent=1 // loop_body
      %s23 = ssub.s32 %s18, 1
      %s24 = ssub.s32 %s18, 2
      %s31 = sadd.s32 1, %s26
      %p32 = scmp.ge.s32.totalorder %s31, 1
      %s33 = scalar_select %p32, 0, %s31
      %s34 = sadd.s32 1, %s25
      %s35 = scalar_select %p32, %s34, %s25
      %p36 = scmp.ge.s32.totalorder %s35, 2
      %s37 = scalar_select %p36, 0, %s35
      %s38 = ssub.s32 %s25, %s37
      %s39 = ssub.s32 %s26, %s33
      %s40 = sor.u32 %s38, %s39
      %p41 = scmp.eq.s32.totalorder %s40, 0
      %s43 = sadd.s32 %s42, 1
      %s44 = scalar_select %p41, %s42, %s43
      %p47 = pneg %p41
      %p48 = scmp.eq.s32.totalorder %s18, 1
      %p49 = por %p47, %p48
      %p50 = scmp.ne.s32.totalorder %s42, %s45
      %p51 = scmp.eq.s32.totalorder %s18, 0
      %p52 = por %p50, %p51
      %p53 = scmp.ne.s32.totalorder %s42, %s45
      %p54 = scmp.eq.s32.totalorder %s23, 1
      %p55 = por %p53, %p54
      %p56 = scmp.ne.s32.totalorder %s45, %s46
      %p57 = scmp.eq.s32.totalorder %s23, 0
      %p58 = por %p56, %p57
      %p59 = scmp.ne.s32.totalorder %s45, %s46
      %p60 = scmp.eq.s32.totalorder %s24, 1
      %p61 = por %p59, %p60
      %p63 = scmp.ne.s32.totalorder %s46, %s62
      %p64 = scmp.eq.s32.totalorder %s24, 0
      %p65 = por %p63, %p64
      %s66 = ssub.s32 %s25, %s37
      %s67 = ssub.s32 %s26, %s33
      %s68 = sor.u32 %s66, %s67
      %p69 = scmp.eq.s32.totalorder %s68, 0
      %s71 = sadd.s32 %s70, 1
      %s72 = scalar_select %p69, %s70, %s71
      %p75 = pneg %p69
      %p76 = scmp.eq.s32.totalorder %s18, 1
      %p77 = por %p75, %p76
      %p78 = scmp.ne.s32.totalorder %s70, %s73
      %p79 = scmp.eq.s32.totalorder %s18, 0
      %p80 = por %p78, %p79
      %p81 = scmp.ne.s32.totalorder %s70, %s73
      %p82 = scmp.eq.s32.totalorder %s23, 1
      %p83 = por %p81, %p82
      %p84 = scmp.ne.s32.totalorder %s73, %s74
      %p85 = scmp.eq.s32.totalorder %s23, 0
      %p86 = por %p84, %p85
      %p87 = scmp.ne.s32.totalorder %s73, %s74
      %p88 = scmp.eq.s32.totalorder %s24, 1
      %p89 = por %p87, %p88
      %p91 = scmp.ne.s32.totalorder %s74, %s90
      %p92 = scmp.eq.s32.totalorder %s24, 0
      %p93 = por %p91, %p92
      %s95 = sadd.s32 %s94, 1
      %p98 = scmp.eq.s32.totalorder %s18, 1
      %p99 = scmp.ne.s32.totalorder %s94, %s96
      %p100 = scmp.eq.s32.totalorder %s18, 0
      %p101 = por %p99, %p100
      %p102 = scmp.ne.s32.totalorder %s94, %s96
      %p103 = scmp.eq.s32.totalorder %s23, 1
      %p104 = por %p102, %p103
      %p105 = scmp.ne.s32.totalorder %s96, %s97
      %p106 = scmp.eq.s32.totalorder %s23, 0
      %p107 = por %p105, %p106
      %p108 = scmp.ne.s32.totalorder %s96, %s97
      %p109 = scmp.eq.s32.totalorder %s24, 1
      %p110 = por %p108, %p109
      %p112 = scmp.ne.s32.totalorder %s97, %s111
      %p113 = scmp.eq.s32.totalorder %s24, 0
      %p114 = por %p112, %p113
      %s115 = ssub.s32 %s25, %s37
      %p116 = scmp.eq.s32.totalorder %s115, 0
      %s118 = sadd.s32 %s117, 1
      %s119 = scalar_select %p116, %s117, %s118
      %p122 = pneg %p116
      %p123 = scmp.eq.s32.totalorder %s18, 1
      %p124 = por %p122, %p123
      %p125 = scmp.ne.s32.totalorder %s117, %s120
      %p126 = scmp.eq.s32.totalorder %s18, 0
      %p127 = por %p125, %p126
      %p128 = scmp.ne.s32.totalorder %s117, %s120
      %p129 = scmp.eq.s32.totalorder %s23, 1
      %p130 = por %p128, %p129
      %p131 = scmp.ne.s32.totalorder %s120, %s121
      %p132 = scmp.eq.s32.totalorder %s23, 0
      %p133 = por %p131, %p132
      %p134 = scmp.ne.s32.totalorder %s120, %s121
      %p135 = scmp.eq.s32.totalorder %s24, 1
      %p136 = por %p134, %p135
      %p138 = scmp.ne.s32.totalorder %s121, %s137
      %p139 = scmp.eq.s32.totalorder %s24, 0
      %p140 = por %p138, %p139
      %p141 = scmp.le.s32.totalorder 1, %s18
      %p142 = scmp.lt.s32.totalorder %s18, 3
      %p143 = pnand %p141, %p142
      %p144 = pneg %p143
      // Predicated region
      $region9: #{tpu_custom_call.1} parent=5 // pred_check
        _
      $region10: #{tpu_custom_call.1} parent=5 // pred_check_branch
        %146 = sbr.rel (%p143) target = $region12
      $region11: #{tpu_custom_call.1} parent=5 // pred_region
        %s147 = ssub.s32 %s18, 1
        // Predicated region
        $region13: #{tpu_custom_call.1} parent=11 // pred_check
          %p148 = pneg %p107
        $region14: #{tpu_custom_call.1} parent=11 // pred_check_branch
          %150 = sbr.rel (%p148) target = $region16
        $region15: #{tpu_custom_call.1} parent=11 // pred_region
          _
        $region16: #{tpu_custom_call.1} parent=11 // pred_fallthru
          _
      $region12: #{tpu_custom_call.1} parent=5 // pred_fallthru
        _
      %p151 = scmp.lt.s32.totalorder %s18, 2
      // Predicated region
      $region17: #{tpu_custom_call.1} parent=5 // pred_check
        %p152 = pneg %p151
      $region18: #{tpu_custom_call.1} parent=5 // pred_check_branch
        %154 = sbr.rel (%p152) target = $region20
      $region19: #{tpu_custom_call.1} parent=5 // pred_region
        // Predicated region
        $region21: #{tpu_custom_call.1} parent=19 // pred_check
          %p155 = pneg %p52
        $region22: #{tpu_custom_call.1} parent=19 // pred_check_branch
          %157 = sbr.rel (%p155) target = $region24
        $region23: #{tpu_custom_call.1} parent=19 // pred_region
          %s158 = sand.u32 %s42, 1
          %s159 = scalar_lea.sflag [#allocation4], %s158
          %s160 = sand.u32 %s42, 1
          %s161 = smul.addr %s160, 4
          %s162 = scalar_lea.vmem [#allocation3], %s161
          %s163 = smul.u32 2, %s26
          %165 = vsyncadd %s159, 0
          %s166 = smul.addr %s25, 2
          %s167 = sadd.s32 %s163, %s166
          %s168 = smul.addr %s167, 2
          %s169 = scalar_lea.hbm %s0, %s168
          %s171 = sshll.u32 %s169, 4
          %s172 = int_to_ptr.hbm [resolvable:$true] %s171
          %s173 = sshll.u32 %s162, 4
          %s174 = int_to_ptr.vmem [resolvable:$true] %s173
          %176 = dma.hbm_to_vmem [thread:$0]  %s172, 64, %s174, %s159
        $region24: #{tpu_custom_call.1} parent=19 // pred_fallthru
          _
        // Predicated region
        $region25: #{tpu_custom_call.1} parent=19 // pred_check
          %p177 = pneg %p80
        $region26: #{tpu_custom_call.1} parent=19 // pred_check_branch
          %179 = sbr.rel (%p177) target = $region28
        $region27: #{tpu_custom_call.1} parent=19 // pred_region
          %s180 = sand.u32 %s70, 1
          %s181 = scalar_lea.sflag [#allocation7], %s180
          %s182 = sand.u32 %s70, 1
          %s183 = smul.addr %s182, 2
          %s184 = scalar_lea.vmem [#allocation6], %s183
          %s185 = smul.u32 2, %s26
          %187 = vsyncadd %s181, 0
          %s188 = smul.addr %s25, 2
          %s189 = sadd.s32 %s185, %s188
          %s190 = scalar_lea.hbm %s1, %s189
          %s192 = sshll.u32 %s190, 4
          %s193 = int_to_ptr.hbm [resolvable:$true] %s192
          %s194 = sshll.u32 %s184, 4
          %s195 = int_to_ptr.vmem [resolvable:$true] %s194
          %197 = dma.hbm_to_vmem [thread:$0]  %s193, 32, %s195, %s181
        $region28: #{tpu_custom_call.1} parent=19 // pred_fallthru
          _
      $region20: #{tpu_custom_call.1} parent=5 // pred_fallthru
        _
      %p198 = scmp.le.s32.totalorder 1, %s18
      %p199 = scmp.lt.s32.totalorder %s18, 3
      %p200 = pnand %p198, %p199
      %p201 = pneg %p200
      // Predicated region
      $region29: #{tpu_custom_call.1} parent=5 // pred_check
        _
      $region30: #{tpu_custom_call.1} parent=5 // pred_check_branch
        %203 = sbr.rel (%p200) target = $region32
      $region31: #{tpu_custom_call.1} parent=5 // pred_region
        %s204 = ssub.s32 %s18, 1
        %s205 = sand.u32 %s45, 1
        %s206 = scalar_lea.sflag [#allocation4], %s205
        %s207 = sand.u32 %s45, 1
        %s208 = smul.addr %s207, 4
        %s209 = scalar_lea.vmem [#allocation3], %s208
        // Predicated region
        $region33: #{tpu_custom_call.1} parent=31 // pred_check
          %p210 = pneg %p58
        $region34: #{tpu_custom_call.1} parent=31 // pred_check_branch
          %212 = sbr.rel (%p210) target = $region36
        $region35: #{tpu_custom_call.1} parent=31 // pred_region
          %214 = dma.done %s206, 64
        $region36: #{tpu_custom_call.1} parent=31 // pred_fallthru
          _
        %s215 = sand.u32 %s73, 1
        %s216 = scalar_lea.sflag [#allocation7], %s215
        %s217 = sand.u32 %s73, 1
        %s218 = smul.addr %s217, 2
        %s219 = scalar_lea.vmem [#allocation6], %s218
        // Predicated region
        $region37: #{tpu_custom_call.1} parent=31 // pred_check
          %p220 = pneg %p86
        $region38: #{tpu_custom_call.1} parent=31 // pred_check_branch
          %222 = sbr.rel (%p220) target = $region40
        $region39: #{tpu_custom_call.1} parent=31 // pred_region
          %224 = dma.done %s216, 32
        $region40: #{tpu_custom_call.1} parent=31 // pred_fallthru
          _
        %s225 = sand.u32 %s45, 1
        %s226 = scalar_lea.sflag [#allocation4], %s225
        %s227 = sand.u32 %s45, 1
        %s228 = smul.addr %s227, 4
        %s229 = scalar_lea.vmem [#allocation3], %s228
        %p230 = pneg %p58
        %p231 = pneg %p55
        %s232 = sand.u32 %s73, 1
        %s233 = scalar_lea.sflag [#allocation7], %s232
        %s234 = sand.u32 %s73, 1
        %s235 = smul.addr %s234, 2
        %s236 = scalar_lea.vmem [#allocation6], %s235
        %p237 = pneg %p86
        %p238 = pneg %p83
        %p239 = pneg %p107
        %p240 = pneg %p104
        %p241 = pneg %p133
        %p242 = pneg %p130
        %s243 = sand.u32 %s120, 1
        %s244 = scalar_lea.sflag [#allocation5], %s243
        %s245 = sand.u32 %s120, 1
        %s246 = scalar_lea.vmem [#allocation8], %s245
        %s247 = smul.u32 2, %s28
        %s248 = smul.u32 2, %s28
        %p249 = scmp.eq.s32.totalorder %s28, 0
        // Predicated region
        $region41: #{tpu_custom_call.1} parent=31 // pred_check
          %p250 = pneg %p249
        $region42: #{tpu_custom_call.1} parent=31 // pred_check_branch
          %252 = sbr.rel (%p250) target = $region44
        $region43: #{tpu_custom_call.1} parent=31 // pred_region
          %v253 = vlaneseq
          %vm254 = vcmp.ge.s32.totalorder %v253, 0
          %vm255 = vcmp.lt.s32.totalorder %v253, 256
          %vm256 = vmand %vm254, %vm255
          %257 = vst.msk [vmem:[#allocation2] sm:$0x3] %vm256, 0.0
        $region44: #{tpu_custom_call.1} parent=31 // pred_fallthru
          _
        %v258 = vld [vmem:[%s209] sm:$0xf]
        %v259 = vld [vmem:[%s219] sm:$0x3]
        %v260 = vld [vmem:[%s2] sm:$0x3]
        %262 = vst [vmem:[#allocation1] ss:$4 sm:$0xff] %v258
        %v263 = vld.sshfl [vmem:[#allocation1] sm:$0xff pattern:$0x73625140]
        %v264 = vld.sshfl [vmem:[#allocation1 + $0x8] sm:$0xff pattern:$0x73625140]
        %vm267 = vcmask 1041408
        %v268 = vsel %vm267, %v263, -inf
        %v269 = vrot.slane %v268, 4
        %v270 = vmax.f32 %v268, %v269
        %v271 = vrot.slane %v270, 2
        %v272 = vmax.f32 %v270, %v271
        %v273 = vrot.slane %v272, 1
        %v274 = vmax.f32 %v272, %v273
        %v275 = vsel %vm267, %v264, -inf
        %v276 = vrot.slane %v275, 4
        %v277 = vmax.f32 %v275, %v276
        %v278 = vrot.slane %v277, 2
        %v279 = vmax.f32 %v277, %v278
        %v280 = vrot.slane %v279, 1
        %v281 = vmax.f32 %v279, %v280
        %v284 = vrot.slane %v281, 6
        %v285 = vsel %vm267, %v274, %v284
        %v287 = vsub.f32 %v258, %v285
        %v288 = vmul.f32 %v287, 1.442695
        %v289 = vpow.pop %v288
        %291 = vst [vmem:[#allocation1] ss:$4 sm:$0xff] %v289
        %v292 = vld.sshfl [vmem:[#allocation1] sm:$0xff pattern:$0x73625140]
        %v293 = vld.sshfl [vmem:[#allocation1 + $0x8] sm:$0xff pattern:$0x73625140]
        %v296 = vsel %vm267, %v292, 0.0
        %v297 = vrot.slane %v296, 4
        %v298 = vadd.f32 %v296, %v297
        %v299 = vrot.slane %v298, 2
        %v300 = vadd.f32 %v298, %v299
        %v301 = vrot.slane %v300, 1
        %v302 = vadd.f32 %v300, %v301
        %v303 = vsel %vm267, %v293, 0.0
        %v304 = vrot.slane %v303, 4
        %v305 = vadd.f32 %v303, %v304
        %v306 = vrot.slane %v305, 2
        %v307 = vadd.f32 %v305, %v306
        %v308 = vrot.slane %v307, 1
        %v309 = vadd.f32 %v307, %v308
        %v310 = vlog2.pop %v302
        %v311 = vmul.f32 %v310, 0.6931472
        %v312 = vlog2.pop %v309
        %v313 = vmul.f32 %v312, 0.6931472
        %v316 = vrot.slane %v313, 6
        %v317 = vsel %vm267, %v311, %v316
        %v319 = vsub.f32 %v287, %v317
        %vm320 = vcmp.eq.s32.totalorder %v259, 0
        %v322 = vrot.slane %v319, 1
        %v323 = vrot.slane %v319, 2
        %v324 = vrot.slane %v319, 3
        %vm325 = vcmask 1040384
        %v326 = vsel %vm325, %v319, %v322
        %vm327 = vcmask 1042434
        %v328 = vsel %vm327, %v323, %v324
        %v329 = vsel %vm267, %v326, %v328
        %331 = vst [vmem:[#allocation1] sm:$0xff] %v319
        %s332 = scalar_lea.vmem [#allocation1], 1
        %v333 = vld [vmem:[%s332] ss:$2 sm:$0xff]
        %v335 = vsel %vm320, %v329, %v333
        %337 = vset.pattern.permute.xlu0 0
        %338 = vperm.xlu0 %337, %v260
        %v339 = vpop.permute.xlu0 %338
        %v340 = vperm.slane %v339, 0
        %v342 = vperm.slane %v339, 1
        %v344 = vsel %vm320, %v340, %v342
        %v345 = vmul.f32 %v335, 1.442695
        %v346 = vpow.pop %v345
        %v347 = vsub.f32 1.0, %v346
        %v348 = vmul.f32 %v347, %v347
        %v349 = vsub.f32 0.0, %v348
        %v350 = vmul.f32 %v335, %v344
        %v351 = vmul.f32 %v349, %v350
        %v352 = vld [vmem:[#allocation2] sm:$0x3]
        %v353 = vadd.f32 %v352, %v351
        %v354 = vlaneseq
        %vm355 = vcmp.ge.s32.totalorder %v354, 0
        %vm356 = vcmp.lt.s32.totalorder %v354, 256
        %vm357 = vmand %vm355, %vm356
        %358 = vst.msk [vmem:[#allocation2] sm:$0x3] %vm357, %v353
        // Predicated region
        $region45: #{tpu_custom_call.1} parent=31 // pred_check
          %p359 = pneg %p249
        $region46: #{tpu_custom_call.1} parent=31 // pred_check_branch
          %361 = sbr.rel (%p359) target = $region48
        $region47: #{tpu_custom_call.1} parent=31 // pred_region
          %v362 = vld [vmem:[#allocation2] sm:$0x3]
          %v364 = vperm.slane %v362, 0
          %v365 = vperm.slane %v362, 1
          %v368 = vsel %vm325, %v364, 0.0
          %v369 = vsel %vm325, %v365, 0.0
          %v370 = vadd.f32 %v368, %v369
          %371 = vadd.xlane.f32.xlu0 %v370
          %v372 = vpop.xlane.xlu0 %371
          %v373 = vrot.slane %v372, 4
          %v374 = vadd.f32 %v372, %v373
          %v375 = vrot.slane %v374, 2
          %v376 = vadd.f32 %v374, %v375
          %v377 = vrot.slane %v376, 1
          %v378 = vadd.f32 %v376, %v377
          %s379 = vtos %v378
          %v380 = vstv %s379
          %381 = vst [vmem:[%s246] sm:$0x1] %v380
        $region48: #{tpu_custom_call.1} parent=31 // pred_fallthru
          _
        %s382 = sand.u32 %s120, 1
        %s383 = scalar_lea.sflag [#allocation5], %s382
        %s384 = sand.u32 %s120, 1
        %s385 = scalar_lea.vmem [#allocation8], %s384
        // Predicated region
        $region49: #{tpu_custom_call.1} parent=31 // pred_check
          %p386 = pneg %p130
        $region50: #{tpu_custom_call.1} parent=31 // pred_check_branch
          %388 = sbr.rel (%p386) target = $region52
        $region51: #{tpu_custom_call.1} parent=31 // pred_region
          %390 = vsyncadd %s383, 0
          %s391 = scalar_lea.hbm %s3, %s27
          %s393 = sshll.u32 %s385, 4
          %s394 = int_to_ptr.vmem [resolvable:$true] %s393
          %s395 = sshll.u32 %s391, 4
          %s396 = int_to_ptr.hbm [resolvable:$true] %s395
          %398 = dma.vmem_to_hbm [thread:$0]  %s394, 16, %s396, %s383
        $region52: #{tpu_custom_call.1} parent=31 // pred_fallthru
          _
      $region32: #{tpu_custom_call.1} parent=5 // pred_fallthru
        _
      %p399 = scmp.le.s32.totalorder 2, %s18
      // Predicated region
      $region53: #{tpu_custom_call.1} parent=5 // pred_check
        %p400 = pneg %p399
      $region54: #{tpu_custom_call.1} parent=5 // pred_check_branch
        %402 = sbr.rel (%p400) target = $region56
      $region55: #{tpu_custom_call.1} parent=5 // pred_region
        %s403 = ssub.s32 %s18, 2
        // Predicated region
        $region57: #{tpu_custom_call.1} parent=55 // pred_check
          %p404 = pneg %p136
        $region58: #{tpu_custom_call.1} parent=55 // pred_check_branch
          %406 = sbr.rel (%p404) target = $region60
        $region59: #{tpu_custom_call.1} parent=55 // pred_region
          %s407 = sand.u32 %s121, 1
          %s408 = scalar_lea.sflag [#allocation5], %s407
          %s409 = sand.u32 %s121, 1
          %s410 = scalar_lea.vmem [#allocation8], %s409
          %412 = dma.done %s408, 16
        $region60: #{tpu_custom_call.1} parent=55 // pred_fallthru
          _
      $region56: #{tpu_custom_call.1} parent=5 // pred_fallthru
        _
    $region6: #{tpu_custom_call.1} parent=1 // loop_footer
      %s22 = sadd.s32 1, %s18
    $region7: #{tpu_custom_call.1} parent=1 // loop_footer_branch
      %17 = sbr.rel target = $region3
    $region8: #{tpu_custom_call.1} parent=1 // loop_exit
      _
    %413 = vsyncpa [#allocation4], 1
    %s414 = scalar_lea.sflag [#allocation4], 1
    %415 = vsyncpa %s414, 1
    %416 = vsyncpa [#allocation7], 1
    %s417 = scalar_lea.sflag [#allocation7], 1
    %418 = vsyncpa %s417, 1
    %419 = vsyncpa [#allocation5], 1
    %s420 = scalar_lea.sflag [#allocation5], 1
    %421 = vsyncpa %s420, 1

</llo_original>
